<compile_context>
chip_gen: v5e
topology: v5e:2x2
jax: 0.10.0
libtpu: 0.0.40
codegen_flags: <defaults>
</compile_context>

<pallas_src>
import functools

import jax
import jax.numpy as jnp
from jax.experimental import pallas as pl
from jax.experimental.pallas import tpu as pltpu


def _round_up(x, m):
    return ((x + m - 1) // m) * m


def _largest_divisor_leq(n, cap):
    for d in range(min(n, max(cap, 1)), 0, -1):
        if n % d == 0:
            return d
    return 1


def _conv_cat_silu_kernel(xd_ref, xe_ref, w_ref, b_ref, o_ref, xs_ref,
                          *, W, C1, C2, Nb, CHUNK, NUM_CHUNKS):
    """Grid step = (batch block of Nb images) x (one lane chunk of H*W pixels).

    xd_ref: (Nb, C1, Lpad) bf16  dec images, flattened over (H, W), padded with
                                 W+1 zeros at each end (+ chunk round-up).
    xe_ref: (Nb, C2, Lpad) bf16  enc images, same layout.
    w_ref:  (3, Cout, 3*C) bf16  per-kx weights, columns ordered (ky, channel).
    b_ref:  (Cout, 1) f32
    o_ref:  (Nb, Cout, CHUNK) f32  output chunk, NCHW flattened over (H, W).
    xs_ref: (3*C, CHUNK+2) bf16  scratch: ky-stacked, channel-concat patch window.
    """
    C = C1 + C2

    # Hoisted parameter loads: once per grid step, outside per-image / per-kx work.
    w0 = w_ref[0]
    w1 = w_ref[1]
    w2 = w_ref[2]
    bias = b_ref[...]                                    # (Cout, 1) f32

    # Chunk start in the flattened output pixel space.  Fully static when there
    # is only one chunk; otherwise a 256-aligned dynamic offset (CHUNK % 256 == 0).
    if NUM_CHUNKS == 1:
        c0 = 0
    else:
        c0 = pl.multiple_of(pl.program_id(1) * CHUNK, 256)

    # kx edge masks as a single (1, CHUNK) row, broadcast over the Cout rows.
    col = (jax.lax.broadcasted_iota(jnp.int32, (1, CHUNK), 1) + c0) % W
    mask_l = (col != 0).astype(jnp.float32)              # kx=0 invalid at w == 0
    mask_r = (col != W - 1).astype(jnp.float32)          # kx=2 invalid at w == W-1

    for nb in range(Nb):
        # Build the ky-stacked, channel-concatenated patch window for this chunk:
        #   xs[ky*C + c, j] = F_c[c0 + j + ky*W],  F_c = zero-padded flat image.
        # This fuses the torch.cat in VMEM; no HBM concat copy.
        # TODO(synk): if profiles show vld/XLU pressure from the +-1 lane shifted
        # patch reads, roll the (Cout, CHUNK) partials by -kx instead.
        for ky in range(3):
            src = pl.ds(c0 + ky * W, CHUNK + 2)
            xs_ref[ky * C:ky * C + C1, :] = xd_ref[nb, :, src]
            xs_ref[ky * C + C1:(ky + 1) * C, :] = xe_ref[nb, :, src]

        # Three K=3C matmuls (one per kx); bf16 operands, f32 accumulation.
        # TODO(synk): for small C on v6e/v7x, fold kx into the scratch (one K=9C
        # dot with pre-masked scratch rows) to cut MXU fill/drain overhead.
        p0 = jnp.dot(w0, xs_ref[:, 0:CHUNK], preferred_element_type=jnp.float32)
        p1 = jnp.dot(w1, xs_ref[:, 1:CHUNK + 1], preferred_element_type=jnp.float32)
        p2 = jnp.dot(w2, xs_ref[:, 2:CHUNK + 2], preferred_element_type=jnp.float32)

        # With the row-flattened layout, kx=0 at w==0 (kx=2 at w==W-1) reads the
        # neighbouring row's pixel, so those per-kx partials are masked out.
        acc = p0 * mask_l + p1 + p2 * mask_r + bias
        y = acc * jax.nn.sigmoid(acc)                    # SiLU, f32 epilogue
        o_ref[nb, :, :] = y.astype(o_ref.dtype)


def conv_bottleneck(dec, enc, weight, bias, *, compute_dtype=jnp.bfloat16):
    """Forward pass of ConvBottleneck: SiLU(conv3x3(cat([dec, enc], dim=1))).

    dec:    (N, C1, H, W) float32
    enc:    (N, C2, H, W) float32
    weight: (Cout, C1+C2, 3, 3) float32   (PyTorch Conv2d OIHW layout)
    bias:   (Cout,) float32
    returns (N, Cout, H, W) float32 (NCHW)
    """
    N, C1, H, W = dec.shape
    C2 = enc.shape[1]
    C = C1 + C2
    Cout = weight.shape[0]
    assert weight.shape == (Cout, C, 3, 3)
    assert enc.shape == (N, C2, H, W)

    HW = H * W

    # Lane chunk: multiple of 256 (MXU / unmasked-store friendly), VMEM-bounded.
    CHUNK = min(_round_up(HW, 256), 1024)
    HWp = _round_up(HW, CHUNK)
    num_chunks = HWp // CHUNK
    Lpad = HWp + 2 * W + 2

    # Pack several small images per grid step to amortize per-step overhead.
    Nb = _largest_divisor_leq(N, max(1, 2048 // CHUNK))

    isz = jnp.dtype(compute_dtype).itemsize

    # Wrapper-side layout prep.  The bf16 cast and the flat zero-padding fuse
    # into a single XLA copy of the activations; the reshapes are free.
    # TODO(synk): fold the zero-padding into the in-kernel scratch build
    # (memset the ky-overhang of edge chunks) to drop this copy entirely.
    pad_l = W + 1
    pad_r = (HWp - HW) + W + 1
    dec_f = jnp.pad(dec.reshape(N, C1, HW).astype(compute_dtype),
                    ((0, 0), (0, 0), (pad_l, pad_r)))
    enc_f = jnp.pad(enc.reshape(N, C2, HW).astype(compute_dtype),
                    ((0, 0), (0, 0), (pad_l, pad_r)))
    # Per-kx weight tiles: (3, Cout, 3*C), columns ordered (ky, concat-channel).
    w_all = jnp.transpose(weight, (3, 0, 2, 1)).reshape(3, Cout, 3 * C)
    w_all = w_all.astype(compute_dtype)
    b2d = bias.reshape(Cout, 1).astype(jnp.float32)

    kernel = functools.partial(_conv_cat_silu_kernel, W=W, C1=C1, C2=C2,
                               Nb=Nb, CHUNK=CHUNK, NUM_CHUNKS=num_chunks)

    # Both grid axes are independent -> "parallel" (lets v7x's two TCs split the
    # work even for a single image via the spatial-chunk axis).
    cp_kwargs = dict(dimension_semantics=("parallel", "parallel"))

    # Per-step VMEM estimate incl. Pallas double buffering of in/out blocks.
    est_vmem = (2 * Nb * C * Lpad * isz            # dec + enc resident blocks
                + 2 * 9 * Cout * C * isz           # weight tiles
                + 2 * Cout * 4                     # bias
                + 2 * Nb * Cout * CHUNK * 4        # output chunk (f32)
                + 3 * C * (CHUNK + 2) * isz)       # scratch window
    if est_vmem > 12 * 1024 * 1024:
        # Raise the scoped-VMEM limit only when needed, never above the physical
        # capacity (v7x: 64 MiB per TC) minus headroom for compiler scratch.
        phys = 64 * 1024 * 1024
        try:
            phys = int(getattr(pltpu.get_tpu_info(), "vmem_capacity_bytes", phys))
        except Exception:
            pass
        cp_kwargs["vmem_limit_bytes"] = int(min(est_vmem * 3 // 2,
                                                phys - 8 * 1024 * 1024))
        # TODO(synk): if est_vmem itself approaches physical VMEM (huge C*H*W),
        # add a row-tile grid axis so the full image need not stay resident.

    out_flat = pl.pallas_call(
        kernel,
        out_shape=jax.ShapeDtypeStruct((N, Cout, HWp), jnp.float32),
        grid_spec=pltpu.PrefetchScalarGridSpec(
            num_scalar_prefetch=0,
            grid=(N // Nb, num_chunks),
            in_specs=[
                pl.BlockSpec((Nb, C1, Lpad), lambda b, c: (b, 0, 0)),
                pl.BlockSpec((Nb, C2, Lpad), lambda b, c: (b, 0, 0)),
                pl.BlockSpec((3, Cout, 3 * C), lambda b, c: (0, 0, 0)),
                pl.BlockSpec((Cout, 1), lambda b, c: (0, 0)),
            ],
            out_specs=pl.BlockSpec((Nb, Cout, CHUNK), lambda b, c: (b, 0, c)),
            scratch_shapes=[pltpu.VMEM((3 * C, CHUNK + 2), compute_dtype)],
        ),
        compiler_params=pltpu.CompilerParams(**cp_kwargs),
    )(dec_f, enc_f, w_all, b2d)

    if HWp != HW:
        out_flat = out_flat[:, :, :HW]
    return out_flat.reshape(N, Cout, H, W)   # free reshape; already NCHW


def _reference(dec, enc, weight, bias):
    """Pure-JAX reference (cat -> conv3x3 pad=1 -> SiLU) for validation."""
    x = jnp.concatenate([dec, enc], axis=1)
    y = jax.lax.conv_general_dilated(
        x, weight, window_strides=(1, 1), padding="SAME",
        dimension_numbers=("NCHW", "OIHW", "NCHW"))
    y = y + bias.reshape(1, -1, 1, 1)
    return y * jax.nn.sigmoid(y)


if __name__ == "__main__":
    key = jax.random.PRNGKey(0)
    k_dec, k_enc, k_w, k_b = jax.random.split(key, 4)

    N, C1, C2, H, W = 2, 4, 4, 16, 16
    Cin, Cout, ksize = C1 + C2, 8, 3

    dec = jax.random.normal(k_dec, (N, C1, H, W), dtype=jnp.float32)
    enc = jax.random.normal(k_enc, (N, C2, H, W), dtype=jnp.float32)

    # Deterministic synthetic parameters (nn.Conv2d(Cin, Cout, 3, padding=1) shapes).
    fan_in = Cin * ksize * ksize
    bound = float(1.0 / (fan_in ** 0.5))
    weight = jax.random.uniform(k_w, (Cout, Cin, ksize, ksize),
                                minval=-bound, maxval=bound, dtype=jnp.float32)
    bias = jax.random.uniform(k_b, (Cout,), minval=-bound, maxval=bound,
                              dtype=jnp.float32)

    fwd = jax.jit(conv_bottleneck)
    out = jax.block_until_ready(fwd(dec, enc, weight, bias))

    # Tight check: reference with the same bf16 input/weight rounding as the kernel.
    rd = lambda t: t.astype(jnp.bfloat16).astype(jnp.float32)
    ref_bf16 = jax.block_until_ready(_reference(rd(dec), rd(enc), rd(weight), bias))
    # Loose check against exact f32 module semantics (bf16 rounding of inputs /
    # weights is the only approximation in the kernel).
    ref_f32 = jax.block_until_ready(_reference(dec, enc, weight, bias))

    assert out.shape == (N, Cout, H, W), out.shape
    assert jnp.allclose(out, ref_bf16, atol=1e-4, rtol=1e-4), \
        float(jnp.max(jnp.abs(out - ref_bf16)))
    assert jnp.allclose(out, ref_f32, atol=6e-2, rtol=6e-2), \
        float(jnp.max(jnp.abs(out - ref_f32)))

    print("KERNEL_OK")
</pallas_src>

<mosaic_0001>
module attributes {stable_mosaic.version = 11 : i64} {
  func.func @_conv_cat_silu_kernel(%arg0: i32, %arg1: i32, %arg2: memref<2x4x290xbf16, #tpu.memory_space<vmem>>, %arg3: memref<2x4x290xbf16, #tpu.memory_space<vmem>>, %arg4: memref<3x8x24xbf16, #tpu.memory_space<vmem>>, %arg5: memref<8x1xf32, #tpu.memory_space<vmem>>, %arg6: memref<2x8x256xf32, #tpu.memory_space<vmem>>, %arg7: memref<24x258xbf16, #tpu.memory_space<vmem>>) attributes {dimension_semantics = [#tpu.dimension_semantics<parallel>, #tpu.dimension_semantics<parallel>], iteration_bounds = array<i64: 1, 1>, scalar_prefetch = 0 : i64, scratch_operands = 1 : i64, tpu.core_type = #tpu.core_type<tc>, window_params = [{transform_indices = @transform_0, window_bounds = array<i64: 2, 4, 290>}, {transform_indices = @transform_1, window_bounds = array<i64: 2, 4, 290>}, {pipeline_mode = #tpu.pipeline_mode<synchronous>, transform_indices = @transform_2, window_bounds = array<i64: 3, 8, 24>}, {pipeline_mode = #tpu.pipeline_mode<synchronous>, transform_indices = @transform_3, window_bounds = array<i64: 8, 1>}, {transform_indices = @transform_4, window_bounds = array<i64: 2, 8, 256>}]} {
    %c0 = arith.constant 0 : index
    %c0_0 = arith.constant 0 : index
    %c0_1 = arith.constant 0 : index
    %0 = vector.load %arg4[%c0, %c0_0, %c0_1] : memref<3x8x24xbf16, #tpu.memory_space<vmem>>, vector<1x8x24xbf16>
    %1 = vector.shape_cast %0 : vector<1x8x24xbf16> to vector<8x24xbf16>
    %c1 = arith.constant 1 : index
    %c0_2 = arith.constant 0 : index
    %c0_3 = arith.constant 0 : index
    %2 = vector.load %arg4[%c1, %c0_2, %c0_3] : memref<3x8x24xbf16, #tpu.memory_space<vmem>>, vector<1x8x24xbf16>
    %3 = vector.shape_cast %2 : vector<1x8x24xbf16> to vector<8x24xbf16>
    %c2 = arith.constant 2 : index
    %c0_4 = arith.constant 0 : index
    %c0_5 = arith.constant 0 : index
    %4 = vector.load %arg4[%c2, %c0_4, %c0_5] : memref<3x8x24xbf16, #tpu.memory_space<vmem>>, vector<1x8x24xbf16>
    %5 = vector.shape_cast %4 : vector<1x8x24xbf16> to vector<8x24xbf16>
    %c0_6 = arith.constant 0 : index
    %c0_7 = arith.constant 0 : index
    %6 = vector.load %arg5[%c0_6, %c0_7] : memref<8x1xf32, #tpu.memory_space<vmem>>, vector<8x1xf32>
    %7 = tpu.iota {dimensions = array<i32: 1>} : vector<1x256xi32>
    %c0_i32 = arith.constant 0 : i32
    %8 = vector.broadcast %c0_i32 : i32 to vector<1x256xi32>
    %9 = arith.addi %7, %8 : vector<1x256xi32>
    %c16_i32 = arith.constant 16 : i32
    %c0_i32_8 = arith.constant 0 : i32
    %10 = arith.cmpi eq, %c16_i32, %c0_i32_8 : i32
    %c1_i32 = arith.constant 1 : i32
    %11 = arith.select %10, %c1_i32, %c16_i32 : i32
    %12 = vector.broadcast %11 : i32 to vector<1x256xi32>
    %13 = arith.remsi %9, %12 : vector<1x256xi32>
    %c0_i32_9 = arith.constant 0 : i32
    %14 = vector.broadcast %c0_i32_9 : i32 to vector<1x256xi32>
    %15 = arith.cmpi ne, %13, %14 : vector<1x256xi32>
    %c0_i32_10 = arith.constant 0 : i32
    %16 = vector.broadcast %c0_i32_10 : i32 to vector<1x256xi32>
    %17 = arith.cmpi slt, %13, %16 : vector<1x256xi32>
    %c0_i32_11 = arith.constant 0 : i32
    %18 = arith.cmpi slt, %11, %c0_i32_11 : i32
    %19 = vector.broadcast %18 : i1 to vector<1x256xi1>
    %20 = vector.broadcast %19 : vector<1x256xi1> to vector<1x256xi1>
    %21 = arith.xori %17, %20 : vector<1x256xi1>
    %22 = arith.andi %21, %15 : vector<1x256xi1>
    %23 = vector.broadcast %11 : i32 to vector<1x256xi32>
    %24 = arith.addi %13, %23 : vector<1x256xi32>
    %25 = arith.select %22, %24, %13 : vector<1x256xi1>, vector<1x256xi32>
    %c0_i32_12 = arith.constant 0 : i32
    %26 = vector.broadcast %c0_i32_12 : i32 to vector<1x256xi32>
    %27 = arith.cmpi ne, %25, %26 : vector<1x256xi32>
    %28 = arith.extui %27 : vector<1x256xi1> to vector<1x256xi32>
    %29 = arith.sitofp %28 : vector<1x256xi32> to vector<1x256xf32>
    %c15_i32 = arith.constant 15 : i32
    %30 = vector.broadcast %c15_i32 : i32 to vector<1x256xi32>
    %31 = arith.cmpi ne, %25, %30 : vector<1x256xi32>
    %32 = arith.extui %31 : vector<1x256xi1> to vector<1x256xi32>
    %33 = arith.sitofp %32 : vector<1x256xi32> to vector<1x256xf32>
    %c0_13 = arith.constant 0 : index
    %c0_14 = arith.constant 0 : index
    %c0_15 = arith.constant 0 : index
    %34 = vector.load %arg2[%c0_13, %c0_14, %c0_15] : memref<2x4x290xbf16, #tpu.memory_space<vmem>>, vector<1x4x258xbf16>
    %35 = vector.shape_cast %34 : vector<1x4x258xbf16> to vector<4x258xbf16>
    %c0_16 = arith.constant 0 : index
    %c0_17 = arith.constant 0 : index
    %36 = vector.load %arg7[%c0_16, %c0_17] : memref<24x258xbf16, #tpu.memory_space<vmem>>, vector<4x258xbf16>
    tpu.vector_store %arg7[%c0_16, %c0_17], %35 {strides = array<i32>} : memref<24x258xbf16, #tpu.memory_space<vmem>>, vector<4x258xbf16>,
    %c0_18 = arith.constant 0 : index
    %c0_19 = arith.constant 0 : index
    %c0_20 = arith.constant 0 : index
    %37 = vector.load %arg3[%c0_18, %c0_19, %c0_20] : memref<2x4x290xbf16, #tpu.memory_space<vmem>>, vector<1x4x258xbf16>
    %38 = vector.shape_cast %37 : vector<1x4x258xbf16> to vector<4x258xbf16>
    %c4 = arith.constant 4 : index
    %c0_21 = arith.constant 0 : index
    %39 = vector.load %arg7[%c4, %c0_21] : memref<24x258xbf16, #tpu.memory_space<vmem>>, vector<4x258xbf16>
    tpu.vector_store %arg7[%c4, %c0_21], %38 {strides = array<i32>} : memref<24x258xbf16, #tpu.memory_space<vmem>>, vector<4x258xbf16>,
    %c0_22 = arith.constant 0 : index
    %c0_23 = arith.constant 0 : index
    %c16 = arith.constant 16 : index
    %40 = vector.load %arg2[%c0_22, %c0_23, %c16] : memref<2x4x290xbf16, #tpu.memory_space<vmem>>, vector<1x4x258xbf16>
    %41 = vector.shape_cast %40 : vector<1x4x258xbf16> to vector<4x258xbf16>
    %c8 = arith.constant 8 : index
    %c0_24 = arith.constant 0 : index
    %42 = vector.load %arg7[%c8, %c0_24] : memref<24x258xbf16, #tpu.memory_space<vmem>>, vector<4x258xbf16>
    tpu.vector_store %arg7[%c8, %c0_24], %41 {strides = array<i32>} : memref<24x258xbf16, #tpu.memory_space<vmem>>, vector<4x258xbf16>,
    %c0_25 = arith.constant 0 : index
    %c0_26 = arith.constant 0 : index
    %c16_27 = arith.constant 16 : index
    %43 = vector.load %arg3[%c0_25, %c0_26, %c16_27] : memref<2x4x290xbf16, #tpu.memory_space<vmem>>, vector<1x4x258xbf16>
    %44 = vector.shape_cast %43 : vector<1x4x258xbf16> to vector<4x258xbf16>
    %c12 = arith.constant 12 : index
    %c0_28 = arith.constant 0 : index
    %45 = vector.load %arg7[%c12, %c0_28] : memref<24x258xbf16, #tpu.memory_space<vmem>>, vector<4x258xbf16>
    tpu.vector_store %arg7[%c12, %c0_28], %44 {strides = array<i32>} : memref<24x258xbf16, #tpu.memory_space<vmem>>, vector<4x258xbf16>,
    %c0_29 = arith.constant 0 : index
    %c0_30 = arith.constant 0 : index
    %c32 = arith.constant 32 : index
    %46 = vector.load %arg2[%c0_29, %c0_30, %c32] : memref<2x4x290xbf16, #tpu.memory_space<vmem>>, vector<1x4x258xbf16>
    %47 = vector.shape_cast %46 : vector<1x4x258xbf16> to vector<4x258xbf16>
    %c16_31 = arith.constant 16 : index
    %c0_32 = arith.constant 0 : index
    %48 = vector.load %arg7[%c16_31, %c0_32] : memref<24x258xbf16, #tpu.memory_space<vmem>>, vector<4x258xbf16>
    tpu.vector_store %arg7[%c16_31, %c0_32], %47 {strides = array<i32>} : memref<24x258xbf16, #tpu.memory_space<vmem>>, vector<4x258xbf16>,
    %c0_33 = arith.constant 0 : index
    %c0_34 = arith.constant 0 : index
    %c32_35 = arith.constant 32 : index
    %49 = vector.load %arg3[%c0_33, %c0_34, %c32_35] : memref<2x4x290xbf16, #tpu.memory_space<vmem>>, vector<1x4x258xbf16>
    %50 = vector.shape_cast %49 : vector<1x4x258xbf16> to vector<4x258xbf16>
    %c20 = arith.constant 20 : index
    %c0_36 = arith.constant 0 : index
    %51 = vector.load %arg7[%c20, %c0_36] : memref<24x258xbf16, #tpu.memory_space<vmem>>, vector<4x258xbf16>
    tpu.vector_store %arg7[%c20, %c0_36], %50 {strides = array<i32>} : memref<24x258xbf16, #tpu.memory_space<vmem>>, vector<4x258xbf16>,
    %c0_37 = arith.constant 0 : index
    %c0_38 = arith.constant 0 : index
    %52 = vector.load %arg7[%c0_37, %c0_38] : memref<24x258xbf16, #tpu.memory_space<vmem>>, vector<24x256xbf16>
    %cst = arith.constant dense<0.000000e+00> : vector<8x256xf32>
    %53 = tpu.matmul %1, %52, %cst {dimension_numbers = #tpu.dot_dimension_numbers<[1], [0], [0], [1], [0, 0, 1, 1], [], []>} : vector<8x24xbf16>, vector<24x256xbf16>, vector<8x256xf32> -> vector<8x256xf32>
    %c0_39 = arith.constant 0 : index
    %c1_40 = arith.constant 1 : index
    %54 = vector.load %arg7[%c0_39, %c1_40] : memref<24x258xbf16, #tpu.memory_space<vmem>>, vector<24x256xbf16>
    %cst_41 = arith.constant dense<0.000000e+00> : vector<8x256xf32>
    %55 = tpu.matmul %3, %54, %cst_41 {dimension_numbers = #tpu.dot_dimension_numbers<[1], [0], [0], [1], [0, 0, 1, 1], [], []>} : vector<8x24xbf16>, vector<24x256xbf16>, vector<8x256xf32> -> vector<8x256xf32>
    %c0_42 = arith.constant 0 : index
    %c2_43 = arith.constant 2 : index
    %56 = vector.load %arg7[%c0_42, %c2_43] : memref<24x258xbf16, #tpu.memory_space<vmem>>, vector<24x256xbf16>
    %cst_44 = arith.constant dense<0.000000e+00> : vector<8x256xf32>
    %57 = tpu.matmul %5, %56, %cst_44 {dimension_numbers = #tpu.dot_dimension_numbers<[1], [0], [0], [1], [0, 0, 1, 1], [], []>} : vector<8x24xbf16>, vector<24x256xbf16>, vector<8x256xf32> -> vector<8x256xf32>
    %58 = vector.broadcast %29 : vector<1x256xf32> to vector<8x256xf32>
    %59 = arith.mulf %53, %58 : vector<8x256xf32>
    %60 = arith.addf %59, %55 : vector<8x256xf32>
    %61 = vector.broadcast %33 : vector<1x256xf32> to vector<8x256xf32>
    %62 = arith.mulf %57, %61 : vector<8x256xf32>
    %63 = arith.addf %60, %62 : vector<8x256xf32>
    %64 = vector.broadcast %6 : vector<8x1xf32> to vector<8x256xf32>
    %65 = arith.addf %63, %64 : vector<8x256xf32>
    %66 = arith.negf %65 : vector<8x256xf32>
    %67 = math.exp %66 : vector<8x256xf32>
    %cst_45 = arith.constant 1.000000e+00 : f32
    %68 = vector.broadcast %cst_45 : f32 to vector<8x256xf32>
    %69 = arith.addf %68, %67 : vector<8x256xf32>
    %70 = arith.divf %68, %69 : vector<8x256xf32>
    %71 = arith.mulf %65, %70 : vector<8x256xf32>
    %c0_46 = arith.constant 0 : index
    %c0_47 = arith.constant 0 : index
    %c0_48 = arith.constant 0 : index
    %72 = vector.load %arg6[%c0_46, %c0_47, %c0_48] : memref<2x8x256xf32, #tpu.memory_space<vmem>>, vector<1x8x256xf32>
    %73 = vector.shape_cast %72 : vector<1x8x256xf32> to vector<8x256xf32>
    %74 = vector.shape_cast %71 : vector<8x256xf32> to vector<1x8x256xf32>
    tpu.vector_store %arg6[%c0_46, %c0_47, %c0_48], %74 {strides = array<i32>} : memref<2x8x256xf32, #tpu.memory_space<vmem>>, vector<1x8x256xf32>,
    %c1_49 = arith.constant 1 : index
    %c0_50 = arith.constant 0 : index
    %c0_51 = arith.constant 0 : index
    %75 = vector.load %arg2[%c1_49, %c0_50, %c0_51] : memref<2x4x290xbf16, #tpu.memory_space<vmem>>, vector<1x4x258xbf16>
    %76 = vector.shape_cast %75 : vector<1x4x258xbf16> to vector<4x258xbf16>
    %c0_52 = arith.constant 0 : index
    %c0_53 = arith.constant 0 : index
    %77 = vector.load %arg7[%c0_52, %c0_53] : memref<24x258xbf16, #tpu.memory_space<vmem>>, vector<4x258xbf16>
    tpu.vector_store %arg7[%c0_52, %c0_53], %76 {strides = array<i32>} : memref<24x258xbf16, #tpu.memory_space<vmem>>, vector<4x258xbf16>,
    %c1_54 = arith.constant 1 : index
    %c0_55 = arith.constant 0 : index
    %c0_56 = arith.constant 0 : index
    %78 = vector.load %arg3[%c1_54, %c0_55, %c0_56] : memref<2x4x290xbf16, #tpu.memory_space<vmem>>, vector<1x4x258xbf16>
    %79 = vector.shape_cast %78 : vector<1x4x258xbf16> to vector<4x258xbf16>
    %c4_57 = arith.constant 4 : index
    %c0_58 = arith.constant 0 : index
    %80 = vector.load %arg7[%c4_57, %c0_58] : memref<24x258xbf16, #tpu.memory_space<vmem>>, vector<4x258xbf16>
    tpu.vector_store %arg7[%c4_57, %c0_58], %79 {strides = array<i32>} : memref<24x258xbf16, #tpu.memory_space<vmem>>, vector<4x258xbf16>,
    %c1_59 = arith.constant 1 : index
    %c0_60 = arith.constant 0 : index
    %c16_61 = arith.constant 16 : index
    %81 = vector.load %arg2[%c1_59, %c0_60, %c16_61] : memref<2x4x290xbf16, #tpu.memory_space<vmem>>, vector<1x4x258xbf16>
    %82 = vector.shape_cast %81 : vector<1x4x258xbf16> to vector<4x258xbf16>
    %c8_62 = arith.constant 8 : index
    %c0_63 = arith.constant 0 : index
    %83 = vector.load %arg7[%c8_62, %c0_63] : memref<24x258xbf16, #tpu.memory_space<vmem>>, vector<4x258xbf16>
    tpu.vector_store %arg7[%c8_62, %c0_63], %82 {strides = array<i32>} : memref<24x258xbf16, #tpu.memory_space<vmem>>, vector<4x258xbf16>,
    %c1_64 = arith.constant 1 : index
    %c0_65 = arith.constant 0 : index
    %c16_66 = arith.constant 16 : index
    %84 = vector.load %arg3[%c1_64, %c0_65, %c16_66] : memref<2x4x290xbf16, #tpu.memory_space<vmem>>, vector<1x4x258xbf16>
    %85 = vector.shape_cast %84 : vector<1x4x258xbf16> to vector<4x258xbf16>
    %c12_67 = arith.constant 12 : index
    %c0_68 = arith.constant 0 : index
    %86 = vector.load %arg7[%c12_67, %c0_68] : memref<24x258xbf16, #tpu.memory_space<vmem>>, vector<4x258xbf16>
    tpu.vector_store %arg7[%c12_67, %c0_68], %85 {strides = array<i32>} : memref<24x258xbf16, #tpu.memory_space<vmem>>, vector<4x258xbf16>,
    %c1_69 = arith.constant 1 : index
    %c0_70 = arith.constant 0 : index
    %c32_71 = arith.constant 32 : index
    %87 = vector.load %arg2[%c1_69, %c0_70, %c32_71] : memref<2x4x290xbf16, #tpu.memory_space<vmem>>, vector<1x4x258xbf16>
    %88 = vector.shape_cast %87 : vector<1x4x258xbf16> to vector<4x258xbf16>
    %c16_72 = arith.constant 16 : index
    %c0_73 = arith.constant 0 : index
    %89 = vector.load %arg7[%c16_72, %c0_73] : memref<24x258xbf16, #tpu.memory_space<vmem>>, vector<4x258xbf16>
    tpu.vector_store %arg7[%c16_72, %c0_73], %88 {strides = array<i32>} : memref<24x258xbf16, #tpu.memory_space<vmem>>, vector<4x258xbf16>,
    %c1_74 = arith.constant 1 : index
    %c0_75 = arith.constant 0 : index
    %c32_76 = arith.constant 32 : index
    %90 = vector.load %arg3[%c1_74, %c0_75, %c32_76] : memref<2x4x290xbf16, #tpu.memory_space<vmem>>, vector<1x4x258xbf16>
    %91 = vector.shape_cast %90 : vector<1x4x258xbf16> to vector<4x258xbf16>
    %c20_77 = arith.constant 20 : index
    %c0_78 = arith.constant 0 : index
    %92 = vector.load %arg7[%c20_77, %c0_78] : memref<24x258xbf16, #tpu.memory_space<vmem>>, vector<4x258xbf16>
    tpu.vector_store %arg7[%c20_77, %c0_78], %91 {strides = array<i32>} : memref<24x258xbf16, #tpu.memory_space<vmem>>, vector<4x258xbf16>,
    %c0_79 = arith.constant 0 : index
    %c0_80 = arith.constant 0 : index
    %93 = vector.load %arg7[%c0_79, %c0_80] : memref<24x258xbf16, #tpu.memory_space<vmem>>, vector<24x256xbf16>
    %cst_81 = arith.constant dense<0.000000e+00> : vector<8x256xf32>
    %94 = tpu.matmul %1, %93, %cst_81 {dimension_numbers = #tpu.dot_dimension_numbers<[1], [0], [0], [1], [0, 0, 1, 1], [], []>} : vector<8x24xbf16>, vector<24x256xbf16>, vector<8x256xf32> -> vector<8x256xf32>
    %c0_82 = arith.constant 0 : index
    %c1_83 = arith.constant 1 : index
    %95 = vector.load %arg7[%c0_82, %c1_83] : memref<24x258xbf16, #tpu.memory_space<vmem>>, vector<24x256xbf16>
    %cst_84 = arith.constant dense<0.000000e+00> : vector<8x256xf32>
    %96 = tpu.matmul %3, %95, %cst_84 {dimension_numbers = #tpu.dot_dimension_numbers<[1], [0], [0], [1], [0, 0, 1, 1], [], []>} : vector<8x24xbf16>, vector<24x256xbf16>, vector<8x256xf32> -> vector<8x256xf32>
    %c0_85 = arith.constant 0 : index
    %c2_86 = arith.constant 2 : index
    %97 = vector.load %arg7[%c0_85, %c2_86] : memref<24x258xbf16, #tpu.memory_space<vmem>>, vector<24x256xbf16>
    %cst_87 = arith.constant dense<0.000000e+00> : vector<8x256xf32>
    %98 = tpu.matmul %5, %97, %cst_87 {dimension_numbers = #tpu.dot_dimension_numbers<[1], [0], [0], [1], [0, 0, 1, 1], [], []>} : vector<8x24xbf16>, vector<24x256xbf16>, vector<8x256xf32> -> vector<8x256xf32>
    %99 = vector.broadcast %29 : vector<1x256xf32> to vector<8x256xf32>
    %100 = arith.mulf %94, %99 : vector<8x256xf32>
    %101 = arith.addf %100, %96 : vector<8x256xf32>
    %102 = vector.broadcast %33 : vector<1x256xf32> to vector<8x256xf32>
    %103 = arith.mulf %98, %102 : vector<8x256xf32>
    %104 = arith.addf %101, %103 : vector<8x256xf32>
    %105 = vector.broadcast %6 : vector<8x1xf32> to vector<8x256xf32>
    %106 = arith.addf %104, %105 : vector<8x256xf32>
    %107 = arith.negf %106 : vector<8x256xf32>
    %108 = math.exp %107 : vector<8x256xf32>
    %cst_88 = arith.constant 1.000000e+00 : f32
    %109 = vector.broadcast %cst_88 : f32 to vector<8x256xf32>
    %110 = arith.addf %109, %108 : vector<8x256xf32>
    %111 = arith.divf %109, %110 : vector<8x256xf32>
    %112 = arith.mulf %106, %111 : vector<8x256xf32>
    %c1_89 = arith.constant 1 : index
    %c0_90 = arith.constant 0 : index
    %c0_91 = arith.constant 0 : index
    %113 = vector.load %arg6[%c1_89, %c0_90, %c0_91] : memref<2x8x256xf32, #tpu.memory_space<vmem>>, vector<1x8x256xf32>
    %114 = vector.shape_cast %113 : vector<1x8x256xf32> to vector<8x256xf32>
    %115 = vector.shape_cast %112 : vector<8x256xf32> to vector<1x8x256xf32>
    tpu.vector_store %arg6[%c1_89, %c0_90, %c0_91], %115 {strides = array<i32>} : memref<2x8x256xf32, #tpu.memory_space<vmem>>, vector<1x8x256xf32>,
    return
  }
  func.func @transform_0(%arg0: i32, %arg1: i32) -> (i32, i32, i32) {
    %c0_i32 = arith.constant 0 : i32
    %c0_i32_0 = arith.constant 0 : i32
    %c0_i32_1 = arith.constant 0 : i32
    return %arg0, %c0_i32, %c0_i32_0 : i32, i32, i32
  }
  func.func @transform_1(%arg0: i32, %arg1: i32) -> (i32, i32, i32) {
    %c0_i32 = arith.constant 0 : i32
    %c0_i32_0 = arith.constant 0 : i32
    %c0_i32_1 = arith.constant 0 : i32
    return %arg0, %c0_i32, %c0_i32_0 : i32, i32, i32
  }
  func.func @transform_2(%arg0: i32, %arg1: i32) -> (i32, i32, i32) {
    %c0_i32 = arith.constant 0 : i32
    %c0_i32_0 = arith.constant 0 : i32
    %c0_i32_1 = arith.constant 0 : i32
    %c0_i32_2 = arith.constant 0 : i32
    return %c0_i32, %c0_i32_0, %c0_i32_1 : i32, i32, i32
  }
  func.func @transform_3(%arg0: i32, %arg1: i32) -> (i32, i32) {
    %c0_i32 = arith.constant 0 : i32
    %c0_i32_0 = arith.constant 0 : i32
    %c0_i32_1 = arith.constant 0 : i32
    return %c0_i32, %c0_i32_0 : i32, i32
  }
  func.func @transform_4(%arg0: i32, %arg1: i32) -> (i32, i32, i32) {
    %c0_i32 = arith.constant 0 : i32
    %c0_i32_0 = arith.constant 0 : i32
    return %arg0, %c0_i32, %arg1 : i32, i32, i32
  }
}

</mosaic_0001>

<llo_original>
// kernel: conv_bottleneck.1
$region0: #{conv_bottleneck.1}
  #allocation0 [shape = 'u32[]', space=smem, size = 0x4, offset = 0x4, fixed_abs, tag = 'smem constant byte address 0x4 - core index']
  #allocation1 [shape = 'u32[72,128]{1,0:T(1,128)}', space=vmem, size = 0x9000, scoped, tag = 'internal scratch']
  #allocation2 [shape = 'bf16[24,258]{1,0:T(8,128)(2,1)}', space=vmem, size = 0x4800, scoped, tag = 'scratch operand']
  %s0 = inlined_call_operand.vmem [shape: bf16[2,4,290], index: 0, kind: input, shape index: {}]
  %s1 = inlined_call_operand.vmem [shape: bf16[2,4,290], index: 1, kind: input, shape index: {}]
  %s2 = inlined_call_operand.vmem [shape: bf16[3,8,24], index: 2, kind: input, shape index: {}]
  %s3 = inlined_call_operand.vmem [shape: f32[8,1], index: 3, kind: input, shape index: {}]
  %s4 = inlined_call_operand.vmem [shape: f32[2,8,256], index: 4, kind: output, shape index: {}]
  %s5 = sld [smem:[#allocation0]]
  $region26: #{conv_bottleneck.1} parent=0
    _
  %s7 = ssub.s32 1, %s5
  %s8 = scalar_select 0, %s7, %s5
  // Predicated region
  $region2: #{conv_bottleneck.1} parent=0 // pred_check
    _
  $region3: #{conv_bottleneck.1} parent=0 // pred_check_branch
    %10 = sbr.rel (0) target = $region5
  $region4: #{conv_bottleneck.1} parent=0 // pred_region
    _
  $region5: #{conv_bottleneck.1} parent=0 // pred_fallthru
    _
  // Predicated region
  $region6: #{conv_bottleneck.1} parent=0 // pred_check
    _
  $region7: #{conv_bottleneck.1} parent=0 // pred_check_branch
    %12 = sbr.rel (0) target = $region9
  $region8: #{conv_bottleneck.1} parent=0 // pred_region
    _
  $region9: #{conv_bottleneck.1} parent=0 // pred_fallthru
    _
  // Predicated region
  $region10: #{conv_bottleneck.1} parent=0 // pred_check
    _
  $region11: #{conv_bottleneck.1} parent=0 // pred_check_branch
    %14 = sbr.rel (0) target = $region13
  $region12: #{conv_bottleneck.1} parent=0 // pred_region
    _
  $region13: #{conv_bottleneck.1} parent=0 // pred_fallthru
    _
  // Predicated region
  $region14: #{conv_bottleneck.1} parent=0 // pred_check
    _
  $region15: #{conv_bottleneck.1} parent=0 // pred_check_branch
    %16 = sbr.rel (0) target = $region17
  $region16: #{conv_bottleneck.1} parent=0 // pred_region
    _
  $region17: #{conv_bottleneck.1} parent=0 // pred_fallthru
    _
  %v18 = vld [vmem:[%s2] sm:$0xf]
  %s19 = scalar_lea.vmem %s2, 4
  %v20 = vld [vmem:[%s19] sm:$0xf]
  %s21 = scalar_lea.vmem %s2, 8
  %v22 = vld [vmem:[%s21] sm:$0xf]
  %v23 = vld [vmem:[%s3] sm:$0xff]
  %v24 = vlaneseq
  %v25 = vand.u32 %v24, 127
  %v26 = vadd.s32 %v25, 128
  %vm27 = vcmp.lt.s32.totalorder %v25, 0
  %v28 = vsub.s32 0, %v25
  %v29 = vsel %vm27, %v28, %v25
  %v30 = vshrl.u32 %v29, 4
  %v31 = vand.u32 %v29, 15
  %v32 = vsub.s32 0, %v31
  %v33 = vsel %vm27, %v32, %v31
  %vm34 = vcmp.lt.s32.totalorder %v26, 0
  %v35 = vsub.s32 0, %v26
  %v36 = vsel %vm34, %v35, %v26
  %v37 = vshrl.u32 %v36, 4
  %v38 = vand.u32 %v36, 15
  %v39 = vsub.s32 0, %v38
  %v40 = vsel %vm34, %v39, %v38
  %vm41 = vcmp.ne.s32.totalorder %v33, 0
  %vm42 = vcmp.ne.s32.totalorder %v40, 0
  %vm43 = vcmp.lt.s32.totalorder %v33, 0
  %vm44 = vcmp.lt.s32.totalorder %v40, 0
  %vm45 = vmand %vm43, %vm41
  %vm46 = vmand %vm44, %vm42
  %v47 = vadd.s32 %v33, 16
  %v48 = vadd.s32 %v40, 16
  %v49 = vsel %vm45, %v47, %v33
  %v50 = vsel %vm46, %v48, %v40
  %vm51 = vcmp.ne.s32.totalorder %v49, 0
  %vm52 = vcmp.ne.s32.totalorder %v50, 0
  %v53 = vsel %vm51, 1, 0
  %v54 = vsel %vm52, 1, 0
  %v55 = vcvt.s32.f32 %v53
  %v56 = vcvt.s32.f32 %v54
  %vm57 = vcmp.ne.s32.totalorder %v49, 15
  %vm58 = vcmp.ne.s32.totalorder %v50, 15
  %v59 = vsel %vm57, 1, 0
  %v60 = vsel %vm58, 1, 0
  %v61 = vcvt.s32.f32 %v59
  %v62 = vcvt.s32.f32 %v60
  %v63 = vld [vmem:[%s0] sm:$0x3f]
  %65 = vst [vmem:[#allocation1] ss:$2 sm:$0xff] %v63
  %v66 = vld.sshfl [vmem:[#allocation1] sm:$0xff pattern:$0x75643120]
  %v67 = vld.sshfl [vmem:[#allocation1 + $0x8] sm:$0xff pattern:$0x75643120]
  %70 = vst [vmem:[#allocation2] sm:$0x33] %v66
  %vm71 = vcmask 9216
  %72 = vst.msk [vmem:[#allocation2 + $0x8] sm:$0x3] %vm71, %v67
  %v73 = vld [vmem:[%s1] sm:$0x3f]
  %s75 = scalar_lea.vmem [#allocation1], 1
  %76 = vst [vmem:[%s75] ss:$2 sm:$0xff] %v73
  %v77 = vld.sshfl [vmem:[#allocation1] sm:$0xff pattern:$0x75643120]
  %v78 = vld.sshfl [vmem:[#allocation1 + $0x8] sm:$0xff pattern:$0x75643120]
  %81 = vst [vmem:[#allocation2] sm:$0xcc] %v77
  %vm82 = vcmask 11266
  %83 = vst.msk [vmem:[#allocation2 + $0x8] sm:$0xc] %vm82, %v78
  %v84 = vld [vmem:[%s0] sm:$0x3f]
  %86 = vst [vmem:[#allocation1] ss:$2 sm:$0xff] %v84
  %v87 = vld.sshfl [vmem:[#allocation1] sm:$0xff pattern:$0x75643120]
  %v89 = vld.sshfl [vmem:[#allocation1 + $0x8] sm:$0xff pattern:$0x75643120]
  %91 = vrot.lane.b32.xlu0 %v87, 112
  %v92 = vpop.permute.xlu0 %91
  %93 = vrot.lane.b32.xlu0 %v89, 112
  %v94 = vpop.permute.xlu0 %93
  %v95 = vrot.slane %v92, 4
  %v96 = vrot.slane %v94, 4
  %vm97 = vcmask 1043456
  %v98 = vsel %vm97, %v95, %v96
  %vm99 = vcmask 916480
  %v100 = vsel %vm99, %v92, %v98
  %103 = vst [vmem:[#allocation2 + $0xc] sm:$0x33] %v100
  %104 = vst.msk [vmem:[#allocation2 + $0x14] sm:$0x3] %vm71, %v94
  %v105 = vld [vmem:[%s1] sm:$0x3f]
  %s107 = scalar_lea.vmem [#allocation1], 1
  %108 = vst [vmem:[%s107] ss:$2 sm:$0xff] %v105
  %v109 = vld.sshfl [vmem:[#allocation1] sm:$0xff pattern:$0x75643120]
  %v111 = vld.sshfl [vmem:[#allocation1 + $0x8] sm:$0xff pattern:$0x75643120]
  %113 = vrot.lane.b32.xlu0 %v109, 112
  %v114 = vpop.permute.xlu0 %113
  %115 = vrot.lane.b32.xlu0 %v111, 112
  %v116 = vpop.permute.xlu0 %115
  %v117 = vrot.slane %v114, 4
  %v118 = vrot.slane %v116, 4
  %v119 = vsel %vm97, %v117, %v118
  %v120 = vsel %vm99, %v114, %v119
  %123 = vst [vmem:[#allocation2 + $0xc] sm:$0xcc] %v120
  %124 = vst.msk [vmem:[#allocation2 + $0x14] sm:$0xc] %vm82, %v116
  %v125 = vld [vmem:[%s0] sm:$0x3f]
  %127 = vst [vmem:[#allocation1] ss:$2 sm:$0xff] %v125
  %v128 = vld.sshfl [vmem:[#allocation1] sm:$0xff pattern:$0x75643120]
  %v130 = vld.sshfl [vmem:[#allocation1 + $0x8] sm:$0xff pattern:$0x75643120]
  %132 = vrot.lane.b32.xlu0 %v128, 96
  %v133 = vpop.permute.xlu0 %132
  %134 = vrot.lane.b32.xlu0 %v130, 96
  %v135 = vpop.permute.xlu0 %134
  %v136 = vrot.slane %v133, 4
  %v137 = vrot.slane %v135, 4
  %v138 = vsel %vm97, %v136, %v137
  %vm139 = vcmask 785408
  %v140 = vsel %vm139, %v133, %v138
  %143 = vst [vmem:[#allocation2 + $0x18] sm:$0x33] %v140
  %144 = vst.msk [vmem:[#allocation2 + $0x20] sm:$0x3] %vm71, %v135
  %v145 = vld [vmem:[%s1] sm:$0x3f]
  %s147 = scalar_lea.vmem [#allocation1], 1
  %148 = vst [vmem:[%s147] ss:$2 sm:$0xff] %v145
  %v149 = vld.sshfl [vmem:[#allocation1] sm:$0xff pattern:$0x75643120]
  %v151 = vld.sshfl [vmem:[#allocation1 + $0x8] sm:$0xff pattern:$0x75643120]
  %153 = vrot.lane.b32.xlu0 %v149, 96
  %v154 = vpop.permute.xlu0 %153
  %155 = vrot.lane.b32.xlu0 %v151, 96
  %v156 = vpop.permute.xlu0 %155
  %v157 = vrot.slane %v154, 4
  %v158 = vrot.slane %v156, 4
  %v159 = vsel %vm97, %v157, %v158
  %v160 = vsel %vm139, %v154, %v159
  %163 = vst [vmem:[#allocation2 + $0x18] sm:$0xcc] %v160
  %164 = vst.msk [vmem:[#allocation2 + $0x20] sm:$0xc] %vm82, %v156
  %v165 = vld [vmem:[#allocation2] sm:$0xff]
  %v166 = vld [vmem:[#allocation2 + $0xc] sm:$0xff]
  %v167 = vld [vmem:[#allocation2 + $0x18] sm:$0xff]
  %v171 = vunpack.c.l.b16 %v165
  %v172 = vunpack.c.h.b16 %v165
  %v173 = vunpack.c.l.b16 %v166
  %v174 = vunpack.c.h.b16 %v166
  %v175 = vunpack.c.l.b16 %v167
  %v176 = vunpack.c.h.b16 %v167
  %v177 = vpack.c.b16 %v173, %v171
  %v178 = vpack.c.b16 %v174, %v172
  %v179 = vpack.c.b16 %v175, %v175
  %v180 = vpack.c.b16 %v176, %v176
  %vm183 = vcmask 195584
  %v185 = vsel %vm183, %v18, 0
  %vm187 = vcmask 1043456
  %v189 = vsel %vm187, %v179, 0
  %v192 = vsel %vm187, %v180, 0
  %194 = vmatpush.bf16.msra.mxu0 0
  %195 = vmatpush.bf16.msra.mxu0 0
  %196 = vmatpush.bf16.msra.mxu0 0
  %197 = vmatpush.bf16.msra.mxu0 0
  %198 = vmatpush.bf16.msra.mxu0 0
  %199 = vmatpush.bf16.msra.mxu0 0
  %200 = vmatpush.bf16.msra.mxu0 %v189
  %201 = vmatpush.bf16.msra.mxu0 %v177
  %202 = vmatmul.bf16.gmra.mxu0 %v185
  %v203 = vpop.f32.mrf.mxu0
  %v204 = vadd.f32 0.0, %v203
  %v205 = vpop.f32.mrf.mxu0
  %206 = vdwg.mxu0
  %207 = vmatpush.bf16.msra.mxu0 0
  %208 = vmatpush.bf16.msra.mxu0 0
  %209 = vmatpush.bf16.msra.mxu0 0
  %210 = vmatpush.bf16.msra.mxu0 0
  %211 = vmatpush.bf16.msra.mxu0 0
  %212 = vmatpush.bf16.msra.mxu0 0
  %213 = vmatpush.bf16.msra.mxu0 %v192
  %214 = vmatpush.bf16.msra.mxu0 %v178
  %215 = vmatmul.bf16.gmra.mxu0 %v185
  %v216 = vpop.f32.mrf.mxu0
  %v217 = vadd.f32 0.0, %v216
  %v218 = vpop.f32.mrf.mxu0
  %219 = vdwg.mxu0
  %v220 = vld [vmem:[#allocation2] sm:$0xff]
  %v221 = vld [vmem:[#allocation2 + $0x8] sm:$0xf]
  %v222 = vld [vmem:[#allocation2 + $0xc] sm:$0xff]
  %v223 = vld [vmem:[#allocation2 + $0x14] sm:$0xf]
  %v224 = vld [vmem:[#allocation2 + $0x18] sm:$0xff]
  %v225 = vld [vmem:[#allocation2 + $0x20] sm:$0xf]
  %v232 = vunpack.c.l.b16 %v220
  %v233 = vunpack.c.h.b16 %v220
  %v234 = vunpack.c.l.b16 %v221
  %v235 = vunpack.c.l.b16 %v222
  %v236 = vunpack.c.h.b16 %v222
  %v237 = vunpack.c.l.b16 %v223
  %v238 = vunpack.c.l.b16 %v224
  %v239 = vunpack.c.h.b16 %v224
  %v240 = vunpack.c.l.b16 %v225
  %v241 = vpack.c.b16 %v235, %v232
  %v242 = vpack.c.b16 %v236, %v233
  %v243 = vpack.c.b16 %v237, %v234
  %v244 = vpack.c.b16 %v238, %v238
  %v245 = vpack.c.b16 %v239, %v239
  %v246 = vpack.c.b16 %v240, %v240
  %247 = vrot.lane.b32.xlu0 %v241, 127
  %v248 = vpop.permute.xlu0 %247
  %249 = vrot.lane.b32.xlu0 %v242, 127
  %v250 = vpop.permute.xlu0 %249
  %251 = vrot.lane.b32.xlu0 %v243, 127
  %v252 = vpop.permute.xlu0 %251
  %253 = vrot.lane.b32.xlu0 %v244, 127
  %v254 = vpop.permute.xlu0 %253
  %255 = vrot.lane.b32.xlu0 %v245, 127
  %v256 = vpop.permute.xlu0 %255
  %257 = vrot.lane.b32.xlu0 %v246, 127
  %v258 = vpop.permute.xlu0 %257
  %vm259 = vcmask 1039360
  %v260 = vsel %vm259, %v248, %v250
  %v261 = vsel %vm259, %v250, %v252
  %v262 = vsel %vm259, %v254, %v256
  %v263 = vsel %vm259, %v256, %v258
  %v267 = vsel %vm183, %v20, 0
  %v270 = vsel %vm187, %v262, 0
  %v273 = vsel %vm187, %v263, 0
  %275 = vmatpush.bf16.msra.mxu0 0
  %276 = vmatpush.bf16.msra.mxu0 0
  %277 = vmatpush.bf16.msra.mxu0 0
  %278 = vmatpush.bf16.msra.mxu0 0
  %279 = vmatpush.bf16.msra.mxu0 0
  %280 = vmatpush.bf16.msra.mxu0 0
  %281 = vmatpush.bf16.msra.mxu0 %v270
  %282 = vmatpush.bf16.msra.mxu0 %v260
  %283 = vmatmul.bf16.gmra.mxu0 %v267
  %v284 = vpop.f32.mrf.mxu0
  %v285 = vadd.f32 0.0, %v284
  %v286 = vpop.f32.mrf.mxu0
  %287 = vdwg.mxu0
  %288 = vmatpush.bf16.msra.mxu0 0
  %289 = vmatpush.bf16.msra.mxu0 0
  %290 = vmatpush.bf16.msra.mxu0 0
  %291 = vmatpush.bf16.msra.mxu0 0
  %292 = vmatpush.bf16.msra.mxu0 0
  %293 = vmatpush.bf16.msra.mxu0 0
  %294 = vmatpush.bf16.msra.mxu0 %v273
  %295 = vmatpush.bf16.msra.mxu0 %v261
  %296 = vmatmul.bf16.gmra.mxu0 %v267
  %v297 = vpop.f32.mrf.mxu0
  %v298 = vadd.f32 0.0, %v297
  %v299 = vpop.f32.mrf.mxu0
  %300 = vdwg.mxu0
  %301 = vrot.lane.b32.xlu0 %v241, 126
  %v302 = vpop.permute.xlu0 %301
  %303 = vrot.lane.b32.xlu0 %v242, 126
  %v304 = vpop.permute.xlu0 %303
  %305 = vrot.lane.b32.xlu0 %v243, 126
  %v306 = vpop.permute.xlu0 %305
  %307 = vrot.lane.b32.xlu0 %v244, 126
  %v308 = vpop.permute.xlu0 %307
  %309 = vrot.lane.b32.xlu0 %v245, 126
  %v310 = vpop.permute.xlu0 %309
  %311 = vrot.lane.b32.xlu0 %v246, 126
  %v312 = vpop.permute.xlu0 %311
  %vm313 = vcmask 1031168
  %v314 = vsel %vm313, %v302, %v304
  %v315 = vsel %vm313, %v304, %v306
  %v316 = vsel %vm313, %v308, %v310
  %v317 = vsel %vm313, %v310, %v312
  %v321 = vsel %vm183, %v22, 0
  %v324 = vsel %vm187, %v316, 0
  %v327 = vsel %vm187, %v317, 0
  %329 = vmatpush.bf16.msra.mxu0 0
  %330 = vmatpush.bf16.msra.mxu0 0
  %331 = vmatpush.bf16.msra.mxu0 0
  %332 = vmatpush.bf16.msra.mxu0 0
  %333 = vmatpush.bf16.msra.mxu0 0
  %334 = vmatpush.bf16.msra.mxu0 0
  %335 = vmatpush.bf16.msra.mxu0 %v324
  %336 = vmatpush.bf16.msra.mxu0 %v314
  %337 = vmatmul.bf16.gmra.mxu0 %v321
  %v338 = vpop.f32.mrf.mxu0
  %v339 = vadd.f32 0.0, %v338
  %v340 = vpop.f32.mrf.mxu0
  %341 = vdwg.mxu0
  %342 = vmatpush.bf16.msra.mxu0 0
  %343 = vmatpush.bf16.msra.mxu0 0
  %344 = vmatpush.bf16.msra.mxu0 0
  %345 = vmatpush.bf16.msra.mxu0 0
  %346 = vmatpush.bf16.msra.mxu0 0
  %347 = vmatpush.bf16.msra.mxu0 0
  %348 = vmatpush.bf16.msra.mxu0 %v327
  %349 = vmatpush.bf16.msra.mxu0 %v315
  %350 = vmatmul.bf16.gmra.mxu0 %v321
  %v351 = vpop.f32.mrf.mxu0
  %v352 = vadd.f32 0.0, %v351
  %v353 = vpop.f32.mrf.mxu0
  %354 = vdwg.mxu0
  %v355 = vmul.f32 %v204, %v55
  %v356 = vmul.f32 %v217, %v56
  %v357 = vadd.f32 %v355, %v285
  %v358 = vadd.f32 %v356, %v298
  %v359 = vmul.f32 %v339, %v61
  %v360 = vmul.f32 %v352, %v62
  %v361 = vadd.f32 %v357, %v359
  %v362 = vadd.f32 %v358, %v360
  %364 = vset.pattern.permute.xlu0 0
  %365 = vperm.xlu0 %364, %v23
  %v366 = vpop.permute.xlu0 %365
  %v368 = vadd.f32 %v361, %v366
  %v369 = vadd.f32 %v362, %v366
  %v370 = vxor.u32 %v368, 2147483648
  %v371 = vxor.u32 %v369, 2147483648
  %v372 = vmul.f32 %v370, 1.442695
  %v373 = vpow.pop %v372
  %v374 = vmul.f32 %v371, 1.442695
  %v375 = vpow.pop %v374
  %v376 = vadd.f32 %v373, 1.0
  %v377 = vadd.f32 %v375, 1.0
  %v378 = vrcp.pop %v376
  %v379 = vmul.f32 %v376, %v378
  %v380 = vsub.f32 1.0, %v379
  %v381 = vmul.f32 %v378, %v380
  %v382 = vadd.f32 %v378, %v381
  %vm383 = vweird.f32 %v376
  %vm384 = vweird.f32 %v378
  %vm385 = vmor %vm383, %vm384
  %v386 = vsel %vm385, %v378, %v382
  %v387 = vand.u32 2147483647, %v376
  %vm388 = vcmp.eq.f32.partialorder %v387, 8.507059e+37
  %v389 = vand.u32 %v376, 2147483648
  %v390 = vor.u32 1.1754944e-38, %v389
  %v391 = vsel %vm388, %v390, %v386
  %v392 = vmul.f32 1.0, %v391
  %v393 = vrcp.pop %v377
  %v394 = vmul.f32 %v377, %v393
  %v395 = vsub.f32 1.0, %v394
  %v396 = vmul.f32 %v393, %v395
  %v397 = vadd.f32 %v393, %v396
  %vm398 = vweird.f32 %v377
  %vm399 = vweird.f32 %v393
  %vm400 = vmor %vm398, %vm399
  %v401 = vsel %vm400, %v393, %v397
  %v402 = vand.u32 2147483647, %v377
  %vm403 = vcmp.eq.f32.partialorder %v402, 8.507059e+37
  %v404 = vand.u32 %v377, 2147483648
  %v405 = vor.u32 1.1754944e-38, %v404
  %v406 = vsel %vm403, %v405, %v401
  %v407 = vmul.f32 1.0, %v406
  %v408 = vmul.f32 %v368, %v392
  %v409 = vmul.f32 %v369, %v407
  %410 = vst [vmem:[%s4] sm:$0xff] %v408
  %411 = vst [vmem:[%s4 + $0x8] sm:$0xff] %v409
  %s412 = scalar_lea.vmem %s0, 6
  %v413 = vld [vmem:[%s412] sm:$0x3f]
  %415 = vst [vmem:[#allocation1] ss:$2 sm:$0xff] %v413
  %v416 = vld.sshfl [vmem:[#allocation1] sm:$0xff pattern:$0x75643120]
  %v417 = vld.sshfl [vmem:[#allocation1 + $0x8] sm:$0xff pattern:$0x75643120]
  %420 = vst [vmem:[#allocation2] sm:$0x33] %v416
  %421 = vst.msk [vmem:[#allocation2 + $0x8] sm:$0x3] %vm71, %v417
  %s422 = scalar_lea.vmem %s1, 6
  %v423 = vld [vmem:[%s422] sm:$0x3f]
  %s425 = scalar_lea.vmem [#allocation1], 1
  %426 = vst [vmem:[%s425] ss:$2 sm:$0xff] %v423
  %v427 = vld.sshfl [vmem:[#allocation1] sm:$0xff pattern:$0x75643120]
  %v428 = vld.sshfl [vmem:[#allocation1 + $0x8] sm:$0xff pattern:$0x75643120]
  %431 = vst [vmem:[#allocation2] sm:$0xcc] %v427
  %432 = vst.msk [vmem:[#allocation2 + $0x8] sm:$0xc] %vm82, %v428
  %v433 = vld [vmem:[%s412] sm:$0x3f]
  %435 = vst [vmem:[#allocation1] ss:$2 sm:$0xff] %v433
  %v436 = vld.sshfl [vmem:[#allocation1] sm:$0xff pattern:$0x75643120]
  %v438 = vld.sshfl [vmem:[#allocation1 + $0x8] sm:$0xff pattern:$0x75643120]
  %440 = vrot.lane.b32.xlu0 %v436, 112
  %v441 = vpop.permute.xlu0 %440
  %442 = vrot.lane.b32.xlu0 %v438, 112
  %v443 = vpop.permute.xlu0 %442
  %v444 = vrot.slane %v441, 4
  %v445 = vrot.slane %v443, 4
  %v446 = vsel %vm97, %v444, %v445
  %v447 = vsel %vm99, %v441, %v446
  %450 = vst [vmem:[#allocation2 + $0xc] sm:$0x33] %v447
  %451 = vst.msk [vmem:[#allocation2 + $0x14] sm:$0x3] %vm71, %v443
  %v452 = vld [vmem:[%s422] sm:$0x3f]
  %s454 = scalar_lea.vmem [#allocation1], 1
  %455 = vst [vmem:[%s454] ss:$2 sm:$0xff] %v452
  %v456 = vld.sshfl [vmem:[#allocation1] sm:$0xff pattern:$0x75643120]
  %v458 = vld.sshfl [vmem:[#allocation1 + $0x8] sm:$0xff pattern:$0x75643120]
  %460 = vrot.lane.b32.xlu0 %v456, 112
  %v461 = vpop.permute.xlu0 %460
  %462 = vrot.lane.b32.xlu0 %v458, 112
  %v463 = vpop.permute.xlu0 %462
  %v464 = vrot.slane %v461, 4
  %v465 = vrot.slane %v463, 4
  %v466 = vsel %vm97, %v464, %v465
  %v467 = vsel %vm99, %v461, %v466
  %470 = vst [vmem:[#allocation2 + $0xc] sm:$0xcc] %v467
  %471 = vst.msk [vmem:[#allocation2 + $0x14] sm:$0xc] %vm82, %v463
  %v472 = vld [vmem:[%s412] sm:$0x3f]
  %474 = vst [vmem:[#allocation1] ss:$2 sm:$0xff] %v472
  %v475 = vld.sshfl [vmem:[#allocation1] sm:$0xff pattern:$0x75643120]
  %v477 = vld.sshfl [vmem:[#allocation1 + $0x8] sm:$0xff pattern:$0x75643120]
  %479 = vrot.lane.b32.xlu0 %v475, 96
  %v480 = vpop.permute.xlu0 %479
  %481 = vrot.lane.b32.xlu0 %v477, 96
  %v482 = vpop.permute.xlu0 %481
  %v483 = vrot.slane %v480, 4
  %v484 = vrot.slane %v482, 4
  %v485 = vsel %vm97, %v483, %v484
  %v486 = vsel %vm139, %v480, %v485
  %489 = vst [vmem:[#allocation2 + $0x18] sm:$0x33] %v486
  %490 = vst.msk [vmem:[#allocation2 + $0x20] sm:$0x3] %vm71, %v482
  %v491 = vld [vmem:[%s422] sm:$0x3f]
  %s493 = scalar_lea.vmem [#allocation1], 1
  %494 = vst [vmem:[%s493] ss:$2 sm:$0xff] %v491
  %v495 = vld.sshfl [vmem:[#allocation1] sm:$0xff pattern:$0x75643120]
  %v497 = vld.sshfl [vmem:[#allocation1 + $0x8] sm:$0xff pattern:$0x75643120]
  %499 = vrot.lane.b32.xlu0 %v495, 96
  %v500 = vpop.permute.xlu0 %499
  %501 = vrot.lane.b32.xlu0 %v497, 96
  %v502 = vpop.permute.xlu0 %501
  %v503 = vrot.slane %v500, 4
  %v504 = vrot.slane %v502, 4
  %v505 = vsel %vm97, %v503, %v504
  %v506 = vsel %vm139, %v500, %v505
  %509 = vst [vmem:[#allocation2 + $0x18] sm:$0xcc] %v506
  %510 = vst.msk [vmem:[#allocation2 + $0x20] sm:$0xc] %vm82, %v502
  %v511 = vld [vmem:[#allocation2] sm:$0xff]
  %v512 = vld [vmem:[#allocation2 + $0xc] sm:$0xff]
  %v513 = vld [vmem:[#allocation2 + $0x18] sm:$0xff]
  %v517 = vunpack.c.l.b16 %v511
  %v518 = vunpack.c.h.b16 %v511
  %v519 = vunpack.c.l.b16 %v512
  %v520 = vunpack.c.h.b16 %v512
  %v521 = vunpack.c.l.b16 %v513
  %v522 = vunpack.c.h.b16 %v513
  %v523 = vpack.c.b16 %v519, %v517
  %v524 = vpack.c.b16 %v520, %v518
  %v525 = vpack.c.b16 %v521, %v521
  %v526 = vpack.c.b16 %v522, %v522
  %v530 = vsel %vm187, %v525, 0
  %v533 = vsel %vm187, %v526, 0
  %535 = vmatpush.bf16.msra.mxu0 0
  %536 = vmatpush.bf16.msra.mxu0 0
  %537 = vmatpush.bf16.msra.mxu0 0
  %538 = vmatpush.bf16.msra.mxu0 0
  %539 = vmatpush.bf16.msra.mxu0 0
  %540 = vmatpush.bf16.msra.mxu0 0
  %541 = vmatpush.bf16.msra.mxu0 %v530
  %542 = vmatpush.bf16.msra.mxu0 %v523
  %543 = vmatmul.bf16.gmra.mxu0 %v185
  %v544 = vpop.f32.mrf.mxu0
  %v545 = vadd.f32 0.0, %v544
  %v546 = vpop.f32.mrf.mxu0
  %547 = vdwg.mxu0
  %548 = vmatpush.bf16.msra.mxu0 0
  %549 = vmatpush.bf16.msra.mxu0 0
  %550 = vmatpush.bf16.msra.mxu0 0
  %551 = vmatpush.bf16.msra.mxu0 0
  %552 = vmatpush.bf16.msra.mxu0 0
  %553 = vmatpush.bf16.msra.mxu0 0
  %554 = vmatpush.bf16.msra.mxu0 %v533
  %555 = vmatpush.bf16.msra.mxu0 %v524
  %556 = vmatmul.bf16.gmra.mxu0 %v185
  %v557 = vpop.f32.mrf.mxu0
  %v558 = vadd.f32 0.0, %v557
  %v559 = vpop.f32.mrf.mxu0
  %560 = vdwg.mxu0
  %v561 = vld [vmem:[#allocation2] sm:$0xff]
  %v562 = vld [vmem:[#allocation2 + $0x8] sm:$0xf]
  %v563 = vld [vmem:[#allocation2 + $0xc] sm:$0xff]
  %v564 = vld [vmem:[#allocation2 + $0x14] sm:$0xf]
  %v565 = vld [vmem:[#allocation2 + $0x18] sm:$0xff]
  %v566 = vld [vmem:[#allocation2 + $0x20] sm:$0xf]
  %v573 = vunpack.c.l.b16 %v561
  %v574 = vunpack.c.h.b16 %v561
  %v575 = vunpack.c.l.b16 %v562
  %v576 = vunpack.c.l.b16 %v563
  %v577 = vunpack.c.h.b16 %v563
  %v578 = vunpack.c.l.b16 %v564
  %v579 = vunpack.c.l.b16 %v565
  %v580 = vunpack.c.h.b16 %v565
  %v581 = vunpack.c.l.b16 %v566
  %v582 = vpack.c.b16 %v576, %v573
  %v583 = vpack.c.b16 %v577, %v574
  %v584 = vpack.c.b16 %v578, %v575
  %v585 = vpack.c.b16 %v579, %v579
  %v586 = vpack.c.b16 %v580, %v580
  %v587 = vpack.c.b16 %v581, %v581
  %588 = vrot.lane.b32.xlu0 %v582, 127
  %v589 = vpop.permute.xlu0 %588
  %590 = vrot.lane.b32.xlu0 %v583, 127
  %v591 = vpop.permute.xlu0 %590
  %592 = vrot.lane.b32.xlu0 %v584, 127
  %v593 = vpop.permute.xlu0 %592
  %594 = vrot.lane.b32.xlu0 %v585, 127
  %v595 = vpop.permute.xlu0 %594
  %596 = vrot.lane.b32.xlu0 %v586, 127
  %v597 = vpop.permute.xlu0 %596
  %598 = vrot.lane.b32.xlu0 %v587, 127
  %v599 = vpop.permute.xlu0 %598
  %v600 = vsel %vm259, %v589, %v591
  %v601 = vsel %vm259, %v591, %v593
  %v602 = vsel %vm259, %v595, %v597
  %v603 = vsel %vm259, %v597, %v599
  %v607 = vsel %vm187, %v602, 0
  %v610 = vsel %vm187, %v603, 0
  %612 = vmatpush.bf16.msra.mxu0 0
  %613 = vmatpush.bf16.msra.mxu0 0
  %614 = vmatpush.bf16.msra.mxu0 0
  %615 = vmatpush.bf16.msra.mxu0 0
  %616 = vmatpush.bf16.msra.mxu0 0
  %617 = vmatpush.bf16.msra.mxu0 0
  %618 = vmatpush.bf16.msra.mxu0 %v607
  %619 = vmatpush.bf16.msra.mxu0 %v600
  %620 = vmatmul.bf16.gmra.mxu0 %v267
  %v621 = vpop.f32.mrf.mxu0
  %v622 = vadd.f32 0.0, %v621
  %v623 = vpop.f32.mrf.mxu0
  %624 = vdwg.mxu0
  %625 = vmatpush.bf16.msra.mxu0 0
  %626 = vmatpush.bf16.msra.mxu0 0
  %627 = vmatpush.bf16.msra.mxu0 0
  %628 = vmatpush.bf16.msra.mxu0 0
  %629 = vmatpush.bf16.msra.mxu0 0
  %630 = vmatpush.bf16.msra.mxu0 0
  %631 = vmatpush.bf16.msra.mxu0 %v610
  %632 = vmatpush.bf16.msra.mxu0 %v601
  %633 = vmatmul.bf16.gmra.mxu0 %v267
  %v634 = vpop.f32.mrf.mxu0
  %v635 = vadd.f32 0.0, %v634
  %v636 = vpop.f32.mrf.mxu0
  %637 = vdwg.mxu0
  %638 = vrot.lane.b32.xlu0 %v582, 126
  %v639 = vpop.permute.xlu0 %638
  %640 = vrot.lane.b32.xlu0 %v583, 126
  %v641 = vpop.permute.xlu0 %640
  %642 = vrot.lane.b32.xlu0 %v584, 126
  %v643 = vpop.permute.xlu0 %642
  %644 = vrot.lane.b32.xlu0 %v585, 126
  %v645 = vpop.permute.xlu0 %644
  %646 = vrot.lane.b32.xlu0 %v586, 126
  %v647 = vpop.permute.xlu0 %646
  %648 = vrot.lane.b32.xlu0 %v587, 126
  %v649 = vpop.permute.xlu0 %648
  %v650 = vsel %vm313, %v639, %v641
  %v651 = vsel %vm313, %v641, %v643
  %v652 = vsel %vm313, %v645, %v647
  %v653 = vsel %vm313, %v647, %v649
  %v657 = vsel %vm187, %v652, 0
  %v660 = vsel %vm187, %v653, 0
  %662 = vmatpush.bf16.msra.mxu0 0
  %663 = vmatpush.bf16.msra.mxu0 0
  %664 = vmatpush.bf16.msra.mxu0 0
  %665 = vmatpush.bf16.msra.mxu0 0
  %666 = vmatpush.bf16.msra.mxu0 0
  %667 = vmatpush.bf16.msra.mxu0 0
  %668 = vmatpush.bf16.msra.mxu0 %v657
  %669 = vmatpush.bf16.msra.mxu0 %v650
  %670 = vmatmul.bf16.gmra.mxu0 %v321
  %v671 = vpop.f32.mrf.mxu0
  %v672 = vadd.f32 0.0, %v671
  %v673 = vpop.f32.mrf.mxu0
  %674 = vdwg.mxu0
  %675 = vmatpush.bf16.msra.mxu0 0
  %676 = vmatpush.bf16.msra.mxu0 0
  %677 = vmatpush.bf16.msra.mxu0 0
  %678 = vmatpush.bf16.msra.mxu0 0
  %679 = vmatpush.bf16.msra.mxu0 0
  %680 = vmatpush.bf16.msra.mxu0 0
  %681 = vmatpush.bf16.msra.mxu0 %v660
  %682 = vmatpush.bf16.msra.mxu0 %v651
  %683 = vmatmul.bf16.gmra.mxu0 %v321
  %v684 = vpop.f32.mrf.mxu0
  %v685 = vadd.f32 0.0, %v684
  %v686 = vpop.f32.mrf.mxu0
  %687 = vdwg.mxu0
  %v688 = vmul.f32 %v545, %v55
  %v689 = vmul.f32 %v558, %v56
  %v690 = vadd.f32 %v688, %v622
  %v691 = vadd.f32 %v689, %v635
  %v692 = vmul.f32 %v672, %v61
  %v693 = vmul.f32 %v685, %v62
  %v694 = vadd.f32 %v690, %v692
  %v695 = vadd.f32 %v691, %v693
  %v696 = vadd.f32 %v694, %v366
  %v697 = vadd.f32 %v695, %v366
  %v698 = vxor.u32 %v696, 2147483648
  %v699 = vxor.u32 %v697, 2147483648
  %v700 = vmul.f32 %v698, 1.442695
  %v701 = vpow.pop %v700
  %v702 = vmul.f32 %v699, 1.442695
  %v703 = vpow.pop %v702
  %v704 = vadd.f32 %v701, 1.0
  %v705 = vadd.f32 %v703, 1.0
  %v706 = vrcp.pop %v704
  %v707 = vmul.f32 %v704, %v706
  %v708 = vsub.f32 1.0, %v707
  %v709 = vmul.f32 %v706, %v708
  %v710 = vadd.f32 %v706, %v709
  %vm711 = vweird.f32 %v704
  %vm712 = vweird.f32 %v706
  %vm713 = vmor %vm711, %vm712
  %v714 = vsel %vm713, %v706, %v710
  %v715 = vand.u32 2147483647, %v704
  %vm716 = vcmp.eq.f32.partialorder %v715, 8.507059e+37
  %v717 = vand.u32 %v704, 2147483648
  %v718 = vor.u32 1.1754944e-38, %v717
  %v719 = vsel %vm716, %v718, %v714
  %v720 = vmul.f32 1.0, %v719
  %v721 = vrcp.pop %v705
  %v722 = vmul.f32 %v705, %v721
  %v723 = vsub.f32 1.0, %v722
  %v724 = vmul.f32 %v721, %v723
  %v725 = vadd.f32 %v721, %v724
  %vm726 = vweird.f32 %v705
  %vm727 = vweird.f32 %v721
  %vm728 = vmor %vm726, %vm727
  %v729 = vsel %vm728, %v721, %v725
  %v730 = vand.u32 2147483647, %v705
  %vm731 = vcmp.eq.f32.partialorder %v730, 8.507059e+37
  %v732 = vand.u32 %v705, 2147483648
  %v733 = vor.u32 1.1754944e-38, %v732
  %v734 = vsel %vm731, %v733, %v729
  %v735 = vmul.f32 1.0, %v734
  %v736 = vmul.f32 %v696, %v720
  %v737 = vmul.f32 %v697, %v735
  %s738 = scalar_lea.vmem %s4, 16
  %739 = vst [vmem:[%s738] sm:$0xff] %v736
  %740 = vst [vmem:[%s738 + $0x8] sm:$0xff] %v737
  // Predicated region
  $region18: #{conv_bottleneck.1} parent=0 // pred_check
    _
  $region19: #{conv_bottleneck.1} parent=0 // pred_check_branch
    %742 = sbr.rel (0) target = $region21
  $region20: #{conv_bottleneck.1} parent=0 // pred_region
    _
  $region21: #{conv_bottleneck.1} parent=0 // pred_fallthru
    _
  // Predicated region
  $region22: #{conv_bottleneck.1} parent=0 // pred_check
    _
  $region23: #{conv_bottleneck.1} parent=0 // pred_check_branch
    %744 = sbr.rel (0) target = $region25
  $region24: #{conv_bottleneck.1} parent=0 // pred_region
    _
  $region25: #{conv_bottleneck.1} parent=0 // pred_fallthru
    _

</llo_original>
